<compile_context>
chip_gen: v5e
topology: v5e:2x2
jax: 0.10.0
libtpu: 0.0.40
codegen_flags: <defaults>
</compile_context>

<pallas_src>
import functools

import jax
import jax.numpy as jnp
from jax.experimental import pallas as pl
from jax.experimental.pallas import tpu as pltpu


# ------------------------------ helpers ------------------------------------ #

def _round_up(x, n):
    return (x + n - 1) // n * n


def _pad_to(a, shape):
    pads = tuple((0, s - d) for d, s in zip(a.shape, shape))
    if all(p == (0, 0) for p in pads):
        return a
    return jnp.pad(a, pads)


def _pick_block_rows(n_rows, d_pad, x_itemsize, w_itemsize,
                     vmem_budget=48 * 1024 * 1024):
    # Largest 8-aligned row tile that (a) keeps >= 2 grid steps where possible
    # (pipelining + v7x dual TensorCores) and (b) fits the double-buffered x/out tiles
    # plus the resident (Dp, Dp) weight inside a conservative VMEM budget
    # (64 MiB physical per TensorCore on v7x, leave headroom for scratch/spills).
    w_bytes = d_pad * d_pad * w_itemsize

    def fits(tq):
        # x tile + out tile, each double-buffered; f32 vreg working copies not counted.
        tile_bytes = 2 * 2 * tq * d_pad * max(x_itemsize, 4)
        return tile_bytes + w_bytes <= vmem_budget

    for cand in (512, 256, 128, 64, 32, 16, 8):
        if n_rows >= 2 * cand and fits(cand):
            return cand
    return 8


def _const_spec(block_shape, index_map):
    # Constant-index operand -> single buffer (no point double-buffering a block whose
    # index_map is constant across the whole grid).
    return pl.BlockSpec(block_shape, index_map, pipeline_mode=pl.Buffered(1))


# ------------------------------ kernels ------------------------------------ #

def _prenorm_ln_kernel(x_ref, m_ref, g_ref, b_ref, w_ref, wb_ref, o_ref, *, eps, inv_d):
    x = x_ref[...].astype(jnp.float32)             # (tq, Dp)
    m = m_ref[...].astype(jnp.float32)             # (tq, 1)
    # Fused one-pass LayerNorm statistics over the *real* feature width; padded lanes of
    # x are zero so they contribute nothing to either sum.
    s1 = jnp.sum(x, axis=-1, keepdims=True)
    s2 = jnp.sum(x * x, axis=-1, keepdims=True)
    mu = s1 * inv_d
    var = s2 * inv_d - mu * mu
    h = (x - mu) * jax.lax.rsqrt(var + eps)
    h = h * g_ref[...] + b_ref[...]                # zero-padded gamma/beta kill padded lanes
    h = h * m                                      # norm(x) * m
    # block = Linear(D, D) on the MXU (LHS cast to weight dtype, f32 accumulation).
    # TODO(synk): training-mode dropout (p_dropout > 0) not implemented; eval semantics.
    y = jnp.dot(h.astype(w_ref.dtype), w_ref[...],
                preferred_element_type=jnp.float32) + wb_ref[...]
    o_ref[...] = ((x + y) * m).astype(o_ref.dtype)


def _prenorm_adaln_kernel(x_ref, m_ref, g_ref, b_ref, w_ref, wb_ref, o_ref,
                          *, eps, k, c, inv_d):
    x = x_ref[0].astype(jnp.float32)               # (tq, Dp)
    m = m_ref[0].astype(jnp.float32)               # (tq, 1)
    s1 = jnp.sum(x, axis=-1, keepdims=True)
    s2 = jnp.sum(x * x, axis=-1, keepdims=True)
    mu = s1 * inv_d
    var = s2 * inv_d - mu * mu
    h = (x - mu) * jax.lax.rsqrt(var + eps)        # F.layer_norm, no affine
    h = c * (1.0 - k * h) * h                      # .detach() is a forward-pass no-op
    h = g_ref[...] * h + b_ref[...]                # g = exp(log_gamma) precomputed in glue
    h = h * m
    y = jnp.dot(h.astype(w_ref.dtype), w_ref[...],
                preferred_element_type=jnp.float32) + wb_ref[...]
    o_ref[0] = ((x + y) * m).astype(o_ref.dtype)


# ------------------------------ wrappers ------------------------------------ #

def prenorm_residual_ln(x, m, gamma, beta, w, wb, *, eps=1e-5, block_rows=None):
    B, T, D = x.shape
    R = B * T
    Dp = _round_up(D, 128)                                       # lane / MXU alignment

    mm_dtype = jnp.bfloat16 if x.dtype == jnp.bfloat16 else jnp.dtype(w.dtype)
    if block_rows:
        tq = _round_up(block_rows, 8)
    else:
        tq = _pick_block_rows(R, Dp, jnp.dtype(x.dtype).itemsize,
                              jnp.dtype(mm_dtype).itemsize)
    Rp = _round_up(R, tq)

    xf = _pad_to(x.reshape(R, D), (Rp, Dp))
    mf = _pad_to(m.reshape(R, 1).astype(jnp.float32), (Rp, 1))
    g = _pad_to(gamma.reshape(1, D).astype(jnp.float32), (1, Dp))
    b = _pad_to(beta.reshape(1, D).astype(jnp.float32), (1, Dp))
    # TODO(synk): for very large D (e.g. >= 2048 fp32 on v7x's 64 MiB VMEM) the resident
    # (Dp, Dp) weight should be N-tiled via an extra grid axis or held in bf16.
    wp = _pad_to(w.astype(mm_dtype), (Dp, Dp))
    wbp = _pad_to(wb.reshape(1, D).astype(jnp.float32), (1, Dp))

    itemsize = jnp.dtype(x.dtype).itemsize
    out = pl.pallas_call(
        functools.partial(_prenorm_ln_kernel, eps=eps, inv_d=1.0 / D),
        out_shape=jax.ShapeDtypeStruct((Rp, Dp), x.dtype),
        grid=(Rp // tq,),
        in_specs=[
            pl.BlockSpec((tq, Dp), lambda i: (i, 0)),            # x rows
            pl.BlockSpec((tq, 1), lambda i: (i, 0)),             # mask rows
            _const_spec((1, Dp), lambda i: (0, 0)),              # LN gamma
            _const_spec((1, Dp), lambda i: (0, 0)),              # LN beta
            _const_spec((Dp, Dp), lambda i: (0, 0)),             # Linear weight
            _const_spec((1, Dp), lambda i: (0, 0)),              # Linear bias
        ],
        out_specs=pl.BlockSpec((tq, Dp), lambda i: (i, 0)),
        compiler_params=pltpu.CompilerParams(
            dimension_semantics=("parallel",),
            vmem_limit_bytes=64 * 1024 * 1024),
        cost_estimate=pl.CostEstimate(
            flops=2 * Rp * Dp * Dp + 10 * Rp * Dp,
            transcendentals=Rp,
            bytes_accessed=(2 * Rp * Dp + Dp * Dp + 4 * Dp + Rp) * itemsize),
    )(xf, mf, g, b, wp, wbp)
    return out[:R, :D].reshape(B, T, D)


def prenorm_residual_adaln(x, m, l, emb_weight, w, wb, *, eps=1e-5, k=0.1, c=2.0,
                           block_rows=None):
    B, T, D = x.shape
    Dp = _round_up(D, 128)

    mm_dtype = jnp.bfloat16 if x.dtype == jnp.bfloat16 else jnp.dtype(w.dtype)
    if block_rows:
        tq = _round_up(block_rows, 8)
    else:
        tq = _pick_block_rows(T, Dp, jnp.dtype(x.dtype).itemsize,
                              jnp.dtype(mm_dtype).itemsize)
    Tp = _round_up(T, tq)

    # Embedding gather + chunk + exp hoisted to glue: two lane-dense per-batch vectors.
    ada = jnp.take(emb_weight, l, axis=0)                        # (B, 2*D)
    g = _pad_to(jnp.exp(ada[:, :D]).astype(jnp.float32), (B, Dp))  # zero-padded lanes
    b = _pad_to(ada[:, D:].astype(jnp.float32), (B, Dp))

    xf = _pad_to(x, (B, Tp, Dp))
    mf = _pad_to(m.astype(jnp.float32), (B, Tp, 1))
    wp = _pad_to(w.astype(mm_dtype), (Dp, Dp))
    wbp = _pad_to(wb.reshape(1, D).astype(jnp.float32), (1, Dp))

    itemsize = jnp.dtype(x.dtype).itemsize
    out = pl.pallas_call(
        functools.partial(_prenorm_adaln_kernel, eps=eps, k=k, c=c, inv_d=1.0 / D),
        out_shape=jax.ShapeDtypeStruct((B, Tp, Dp), x.dtype),
        grid=(B, Tp // tq),
        in_specs=[
            pl.BlockSpec((1, tq, Dp), lambda bi, ti: (bi, ti, 0)),   # x
            pl.BlockSpec((1, tq, 1), lambda bi, ti: (bi, ti, 0)),    # mask
            pl.BlockSpec((1, Dp), lambda bi, ti: (bi, 0)),           # exp(log_gamma)[b]
            pl.BlockSpec((1, Dp), lambda bi, ti: (bi, 0)),           # beta[b]
            _const_spec((Dp, Dp), lambda bi, ti: (0, 0)),            # Linear weight
            _const_spec((1, Dp), lambda bi, ti: (0, 0)),             # Linear bias
        ],
        out_specs=pl.BlockSpec((1, tq, Dp), lambda bi, ti: (bi, ti, 0)),
        compiler_params=pltpu.CompilerParams(
            dimension_semantics=("parallel", "parallel"),
            vmem_limit_bytes=64 * 1024 * 1024),
        cost_estimate=pl.CostEstimate(
            flops=2 * B * Tp * Dp * Dp + 12 * B * Tp * Dp,
            transcendentals=B * Tp,
            bytes_accessed=(2 * B * Tp * Dp + Dp * Dp + 2 * B * Dp + 2 * Dp + B * Tp)
                           * itemsize),
    )(xf, mf, g, b, wp, wbp)
    return out[:, :T, :D]


# ------------------------------ references (plain JAX) ---------------------- #

def _ref_ln(x, m, gamma, beta, w, wb, eps=1e-5):
    mu = jnp.mean(x, axis=-1, keepdims=True)
    var = jnp.mean((x - mu) ** 2, axis=-1, keepdims=True)
    h = (x - mu) * jax.lax.rsqrt(var + eps) * gamma + beta
    y = (h * m) @ w + wb
    return (x + y) * m


def _ref_adaln(x, m, l, emb_weight, w, wb, eps=1e-5, k=0.1, c=2.0):
    mu = jnp.mean(x, axis=-1, keepdims=True)
    var = jnp.mean((x - mu) ** 2, axis=-1, keepdims=True)
    h = (x - mu) * jax.lax.rsqrt(var + eps)
    h = c * (1.0 - k * h) * h
    ada = emb_weight[l][:, None, :]                              # (B, 1, 2D)
    logg, beta = ada[..., : x.shape[-1]], ada[..., x.shape[-1]:]
    h = jnp.exp(logg) * h + beta
    y = (h * m) @ w + wb
    return (x + y) * m


# ------------------------------ main ----------------------------------------- #

if __name__ == "__main__":
    def run_case(B, T, D, n_levels, block_rows, zero_emb):
        key = jax.random.PRNGKey(0)
        kx, km, kw, kb, kl, ke = jax.random.split(key, 6)

        x = jax.random.normal(kx, (B, T, D), dtype=jnp.float32)
        m = (jax.random.uniform(km, (B, T, 1)) > 0.25).astype(jnp.float32)
        l = jax.random.randint(kl, (B,), 0, n_levels, dtype=jnp.int32)

        # block = Linear(D, D), deterministic init
        w_block = jax.random.normal(kw, (D, D), dtype=jnp.float32) / jnp.sqrt(D)
        b_block = jax.random.normal(kb, (1, D), dtype=jnp.float32) * 0.01

        # norm_type='ln' params (nn.LayerNorm default init)
        ln_gamma = jnp.ones((1, D), dtype=jnp.float32)
        ln_beta = jnp.zeros((1, D), dtype=jnp.float32)

        # norm_type='adaln' embedding (zero-init per the module; non-zero variant to
        # exercise the gamma/beta math path)
        if zero_emb:
            emb_weight = jnp.zeros((n_levels, 2 * D), dtype=jnp.float32)
        else:
            emb_weight = 0.1 * jax.random.normal(ke, (n_levels, 2 * D), dtype=jnp.float32)

        out_ln = jax.block_until_ready(
            prenorm_residual_ln(x, m, ln_gamma, ln_beta, w_block, b_block,
                                block_rows=block_rows))
        ref_ln = _ref_ln(x, m, ln_gamma, ln_beta, w_block, b_block)
        assert jnp.allclose(out_ln, ref_ln, atol=2e-4, rtol=2e-4), "ln mismatch"

        out_ada = jax.block_until_ready(
            prenorm_residual_adaln(x, m, l, emb_weight, w_block, b_block,
                                   block_rows=block_rows))
        ref_ada = _ref_adaln(x, m, l, emb_weight, w_block, b_block)
        assert jnp.allclose(out_ada, ref_ada, atol=2e-4, rtol=2e-4), "adaln mismatch"

    # Small shapes from the module spec (exercise the D->128 padding path, tiny tiles,
    # multi-step parallel grid).
    run_case(B=2, T=16, D=32, n_levels=4, block_rows=8, zero_emb=True)
    # 128-aligned feature dim, automatic (VMEM-aware) tile selection, non-zero AdaLN emb.
    run_case(B=2, T=64, D=128, n_levels=4, block_rows=None, zero_emb=False)

    print("KERNEL_OK")
</pallas_src>

<mosaic_0001>
module attributes {stable_mosaic.version = 11 : i64} {
  func.func @_prenorm_ln_kernel(%arg0: i32, %arg1: memref<8x128xf32, #tpu.memory_space<vmem>>, %arg2: memref<8x1xf32, #tpu.memory_space<vmem>>, %arg3: memref<1x128xf32, #tpu.memory_space<vmem>>, %arg4: memref<1x128xf32, #tpu.memory_space<vmem>>, %arg5: memref<128x128xf32, #tpu.memory_space<vmem>>, %arg6: memref<1x128xf32, #tpu.memory_space<vmem>>, %arg7: memref<8x128xf32, #tpu.memory_space<vmem>>) attributes {dimension_semantics = [#tpu.dimension_semantics<parallel>], iteration_bounds = array<i64: 4>, scalar_prefetch = 0 : i64, scratch_operands = 0 : i64, tpu.core_type = #tpu.core_type<tc>, window_params = [{transform_indices = @transform_0, window_bounds = array<i64: 8, 128>}, {transform_indices = @transform_1, window_bounds = array<i64: 8, 1>}, {pipeline_mode = #tpu.pipeline_mode<synchronous>, transform_indices = @transform_2, window_bounds = array<i64: 1, 128>}, {pipeline_mode = #tpu.pipeline_mode<synchronous>, transform_indices = @transform_3, window_bounds = array<i64: 1, 128>}, {pipeline_mode = #tpu.pipeline_mode<synchronous>, transform_indices = @transform_4, window_bounds = array<i64: 128, 128>}, {pipeline_mode = #tpu.pipeline_mode<synchronous>, transform_indices = @transform_5, window_bounds = array<i64: 1, 128>}, {transform_indices = @transform_6, window_bounds = array<i64: 8, 128>}]} {
    %c0 = arith.constant 0 : index
    %c0_0 = arith.constant 0 : index
    %0 = vector.load %arg1[%c0, %c0_0] : memref<8x128xf32, #tpu.memory_space<vmem>>, vector<8x128xf32>
    %c0_1 = arith.constant 0 : index
    %c0_2 = arith.constant 0 : index
    %1 = vector.load %arg2[%c0_1, %c0_2] : memref<8x1xf32, #tpu.memory_space<vmem>>, vector<8x1xf32>
    %cst = arith.constant dense<0.000000e+00> : vector<8xf32>
    %2 = vector.multi_reduction <add>, %0, %cst [1] : vector<8x128xf32> to vector<8xf32>
    %3 = vector.shape_cast %2 : vector<8xf32> to vector<8x1xf32>
    %4 = arith.mulf %0, %0 : vector<8x128xf32>
    %cst_3 = arith.constant dense<0.000000e+00> : vector<8xf32>
    %5 = vector.multi_reduction <add>, %4, %cst_3 [1] : vector<8x128xf32> to vector<8xf32>
    %6 = vector.shape_cast %5 : vector<8xf32> to vector<8x1xf32>
    %cst_4 = arith.constant 3.125000e-02 : f32
    %7 = vector.broadcast %cst_4 : f32 to vector<8x1xf32>
    %8 = arith.mulf %3, %7 : vector<8x1xf32>
    %cst_5 = arith.constant 3.125000e-02 : f32
    %9 = vector.broadcast %cst_5 : f32 to vector<8x1xf32>
    %10 = arith.mulf %6, %9 : vector<8x1xf32>
    %11 = arith.mulf %8, %8 : vector<8x1xf32>
    %12 = arith.subf %10, %11 : vector<8x1xf32>
    %13 = vector.broadcast %8 : vector<8x1xf32> to vector<8x128xf32>
    %14 = arith.subf %0, %13 : vector<8x128xf32>
    %cst_6 = arith.constant 9.99999974E-6 : f32
    %15 = vector.broadcast %cst_6 : f32 to vector<8x1xf32>
    %16 = arith.addf %12, %15 : vector<8x1xf32>
    %17 = math.rsqrt %16 : vector<8x1xf32>
    %18 = vector.broadcast %17 : vector<8x1xf32> to vector<8x128xf32>
    %19 = arith.mulf %14, %18 : vector<8x128xf32>
    %c0_7 = arith.constant 0 : index
    %c0_8 = arith.constant 0 : index
    %20 = vector.load %arg3[%c0_7, %c0_8] : memref<1x128xf32, #tpu.memory_space<vmem>>, vector<1x128xf32>
    %21 = vector.broadcast %20 : vector<1x128xf32> to vector<8x128xf32>
    %22 = arith.mulf %19, %21 : vector<8x128xf32>
    %c0_9 = arith.constant 0 : index
    %c0_10 = arith.constant 0 : index
    %23 = vector.load %arg4[%c0_9, %c0_10] : memref<1x128xf32, #tpu.memory_space<vmem>>, vector<1x128xf32>
    %24 = vector.broadcast %23 : vector<1x128xf32> to vector<8x128xf32>
    %25 = arith.addf %22, %24 : vector<8x128xf32>
    %26 = vector.broadcast %1 : vector<8x1xf32> to vector<8x128xf32>
    %27 = arith.mulf %25, %26 : vector<8x128xf32>
    %c0_11 = arith.constant 0 : index
    %c0_12 = arith.constant 0 : index
    %28 = vector.load %arg5[%c0_11, %c0_12] : memref<128x128xf32, #tpu.memory_space<vmem>>, vector<128x128xf32>
    %cst_13 = arith.constant dense<0.000000e+00> : vector<8x128xf32>
    %29 = tpu.matmul %27, %28, %cst_13 {dimension_numbers = #tpu.dot_dimension_numbers<[1], [0], [0], [1], [0, 0, 1, 1], [], []>} : vector<8x128xf32>, vector<128x128xf32>, vector<8x128xf32> -> vector<8x128xf32>
    %c0_14 = arith.constant 0 : index
    %c0_15 = arith.constant 0 : index
    %30 = vector.load %arg6[%c0_14, %c0_15] : memref<1x128xf32, #tpu.memory_space<vmem>>, vector<1x128xf32>
    %31 = vector.broadcast %30 : vector<1x128xf32> to vector<8x128xf32>
    %32 = arith.addf %29, %31 : vector<8x128xf32>
    %33 = arith.addf %0, %32 : vector<8x128xf32>
    %34 = vector.broadcast %1 : vector<8x1xf32> to vector<8x128xf32>
    %35 = arith.mulf %33, %34 : vector<8x128xf32>
    %c0_16 = arith.constant 0 : index
    %c0_17 = arith.constant 0 : index
    %36 = vector.load %arg7[%c0_16, %c0_17] : memref<8x128xf32, #tpu.memory_space<vmem>>, vector<8x128xf32>
    tpu.vector_store %arg7[%c0_16, %c0_17], %35 {strides = array<i32>} : memref<8x128xf32, #tpu.memory_space<vmem>>, vector<8x128xf32>,
    return
  }
  func.func @transform_0(%arg0: i32) -> (i32, i32) {
    %c0_i32 = arith.constant 0 : i32
    %c0_i32_0 = arith.constant 0 : i32
    return %arg0, %c0_i32 : i32, i32
  }
  func.func @transform_1(%arg0: i32) -> (i32, i32) {
    %c0_i32 = arith.constant 0 : i32
    %c0_i32_0 = arith.constant 0 : i32
    return %arg0, %c0_i32 : i32, i32
  }
  func.func @transform_2(%arg0: i32) -> (i32, i32) {
    %c0_i32 = arith.constant 0 : i32
    %c0_i32_0 = arith.constant 0 : i32
    %c0_i32_1 = arith.constant 0 : i32
    return %c0_i32, %c0_i32_0 : i32, i32
  }
  func.func @transform_3(%arg0: i32) -> (i32, i32) {
    %c0_i32 = arith.constant 0 : i32
    %c0_i32_0 = arith.constant 0 : i32
    %c0_i32_1 = arith.constant 0 : i32
    return %c0_i32, %c0_i32_0 : i32, i32
  }
  func.func @transform_4(%arg0: i32) -> (i32, i32) {
    %c0_i32 = arith.constant 0 : i32
    %c0_i32_0 = arith.constant 0 : i32
    %c0_i32_1 = arith.constant 0 : i32
    return %c0_i32, %c0_i32_0 : i32, i32
  }
  func.func @transform_5(%arg0: i32) -> (i32, i32) {
    %c0_i32 = arith.constant 0 : i32
    %c0_i32_0 = arith.constant 0 : i32
    %c0_i32_1 = arith.constant 0 : i32
    return %c0_i32, %c0_i32_0 : i32, i32
  }
  func.func @transform_6(%arg0: i32) -> (i32, i32) {
    %c0_i32 = arith.constant 0 : i32
    %c0_i32_0 = arith.constant 0 : i32
    return %arg0, %c0_i32 : i32, i32
  }
}

</mosaic_0001>

<llo_original>
// kernel: tpu_custom_call.1
$region0: #{tpu_custom_call.1}
  #allocation0 [shape = 'u32[]', space=smem, size = 0x4, offset = 0x4, fixed_abs, tag = 'smem constant byte address 0x4 - core index']
  #allocation1 [shape = 'u32[72,128]{1,0:T(1,128)}', space=vmem, size = 0x9000, scoped, tag = 'internal scratch']
  %s0 = inlined_call_operand.vmem [shape: f32[32,128], index: 0, kind: input, shape index: {}]
  %s1 = inlined_call_operand.vmem [shape: f32[32,1], index: 1, kind: input, shape index: {}]
  %s2 = inlined_call_operand.vmem [shape: f32[1,128], index: 2, kind: input, shape index: {}]
  %s3 = inlined_call_operand.vmem [shape: f32[1,128], index: 3, kind: input, shape index: {}]
  %s4 = inlined_call_operand.hbm [shape: f32[128,128], index: 4, kind: input, shape index: {}]
  %s5 = inlined_call_operand.vmem [shape: f32[1,128], index: 5, kind: input, shape index: {}]
  %s6 = inlined_call_operand.hbm [shape: f32[32,128], index: 6, kind: output, shape index: {}]
  %s7 = sld [smem:[#allocation0]]
  $region61: #{tpu_custom_call.1} parent=0
    _
  %s9 = ssub.s32 1, %s7
  %s10 = scalar_select 0, %s9, %s7
  $region1: #{tpu_custom_call.1} parent=0
    #allocation2 [shape = 'u8[65536]{0}', space=vmem, size = 0x10000, scoped, tag = 'input window, operand 4, single buffered']
    #allocation3 [shape = 's32[2]{0}', space=sflag, size = 0x8, scoped, tag = 'scoped memory for tpu_custom_call.1']
    #allocation4 [shape = 's32[2]{0}', space=sflag, size = 0x8, scoped, tag = 'scoped memory for tpu_custom_call.1']
    #allocation5 [shape = 'u8[8192]{0}', space=vmem, size = 0x2000, scoped, tag = 'output window, operand 0']
    %11 = vsyncpa [#allocation3], 0
    %12 = vsyncpa [#allocation4], 0
    %s13 = scalar_lea.sflag [#allocation4], 1
    %14 = vsyncpa %s13, 0
    loop: start=0, step=1, limit=6
    $region2: #{tpu_custom_call.1} parent=1 // loop_pre_header
      _
    $region3: #{tpu_custom_call.1} parent=1 // loop_header
      %s16 = sphi 0, %s20
      %p17 = scmp.ge.s32.totalorder %s16, 6
      %s26 = sphi 0, %s28
      %s29 = sphi 0, %s26
      %s30 = sphi 0, %s29
      %s46 = sphi 0, %s30
      %s52 = sphi 0, %s54
      %s55 = sphi 0, %s52
      %s56 = sphi 0, %s55
      %s72 = sphi 0, %s56
      %s76 = sphi 0, %s76
      %s78 = sphi 0, %s76
      %s79 = sphi 0, %s78
      %s93 = sphi 0, %s79
      %s97 = sphi 0, %s97
      %s99 = sphi 0, %s97
      %s100 = sphi 0, %s99
      %s114 = sphi 0, %s100
      %s118 = sphi 0, %s118
      %s120 = sphi 0, %s118
      %s121 = sphi 0, %s120
      %s135 = sphi 0, %s121
      %s139 = sphi 0, %s139
      %s141 = sphi 0, %s139
      %s142 = sphi 0, %s141
      %s156 = sphi 0, %s142
      %s162 = sphi 0, %s164
      %s165 = sphi 0, %s162
      %s166 = sphi 0, %s165
      %s182 = sphi 0, %s166
    $region4: #{tpu_custom_call.1} parent=1 // loop_header_branch
      %19 = sbr.rel (%p17) target = $region8
    $region5: #{tpu_custom_call.1} parent=1 // loop_body
      %s21 = ssub.s32 %s16, 1
      %s22 = ssub.s32 %s16, 2
      %s23 = sadd.s32 %s16, 1
      %s24 = ssub.s32 %s16, %s23
      %p25 = scmp.eq.s32.totalorder %s24, 0
      %s27 = sadd.s32 %s26, 1
      %s28 = scalar_select %p25, %s26, %s27
      %p31 = pneg %p25
      %p32 = scmp.eq.s32.totalorder %s16, 3
      %p33 = por %p31, %p32
      %p34 = scmp.ne.s32.totalorder %s26, %s29
      %p35 = scmp.eq.s32.totalorder %s16, 0
      %p36 = por %p34, %p35
      %p37 = scmp.ne.s32.totalorder %s26, %s29
      %p38 = scmp.eq.s32.totalorder %s21, 3
      %p39 = por %p37, %p38
      %p40 = scmp.ne.s32.totalorder %s29, %s30
      %p41 = scmp.eq.s32.totalorder %s21, 0
      %p42 = por %p40, %p41
      %p43 = scmp.ne.s32.totalorder %s29, %s30
      %p44 = scmp.eq.s32.totalorder %s22, 3
      %p45 = por %p43, %p44
      %p47 = scmp.ne.s32.totalorder %s30, %s46
      %p48 = scmp.eq.s32.totalorder %s22, 0
      %p49 = por %p47, %p48
      %s50 = ssub.s32 %s16, %s23
      %p51 = scmp.eq.s32.totalorder %s50, 0
      %s53 = sadd.s32 %s52, 1
      %s54 = scalar_select %p51, %s52, %s53
      %p57 = pneg %p51
      %p58 = scmp.eq.s32.totalorder %s16, 3
      %p59 = por %p57, %p58
      %p60 = scmp.ne.s32.totalorder %s52, %s55
      %p61 = scmp.eq.s32.totalorder %s16, 0
      %p62 = por %p60, %p61
      %p63 = scmp.ne.s32.totalorder %s52, %s55
      %p64 = scmp.eq.s32.totalorder %s21, 3
      %p65 = por %p63, %p64
      %p66 = scmp.ne.s32.totalorder %s55, %s56
      %p67 = scmp.eq.s32.totalorder %s21, 0
      %p68 = por %p66, %p67
      %p69 = scmp.ne.s32.totalorder %s55, %s56
      %p70 = scmp.eq.s32.totalorder %s22, 3
      %p71 = por %p69, %p70
      %p73 = scmp.ne.s32.totalorder %s56, %s72
      %p74 = scmp.eq.s32.totalorder %s22, 0
      %p75 = por %p73, %p74
      %s77 = sadd.s32 %s76, 1
      %p80 = scmp.eq.s32.totalorder %s16, 3
      %p81 = scmp.ne.s32.totalorder %s76, %s78
      %p82 = scmp.eq.s32.totalorder %s16, 0
      %p83 = por %p81, %p82
      %p84 = scmp.ne.s32.totalorder %s76, %s78
      %p85 = scmp.eq.s32.totalorder %s21, 3
      %p86 = por %p84, %p85
      %p87 = scmp.ne.s32.totalorder %s78, %s79
      %p88 = scmp.eq.s32.totalorder %s21, 0
      %p89 = por %p87, %p88
      %p90 = scmp.ne.s32.totalorder %s78, %s79
      %p91 = scmp.eq.s32.totalorder %s22, 3
      %p92 = por %p90, %p91
      %p94 = scmp.ne.s32.totalorder %s79, %s93
      %p95 = scmp.eq.s32.totalorder %s22, 0
      %p96 = por %p94, %p95
      %s98 = sadd.s32 %s97, 1
      %p101 = scmp.eq.s32.totalorder %s16, 3
      %p102 = scmp.ne.s32.totalorder %s97, %s99
      %p103 = scmp.eq.s32.totalorder %s16, 0
      %p104 = por %p102, %p103
      %p105 = scmp.ne.s32.totalorder %s97, %s99
      %p106 = scmp.eq.s32.totalorder %s21, 3
      %p107 = por %p105, %p106
      %p108 = scmp.ne.s32.totalorder %s99, %s100
      %p109 = scmp.eq.s32.totalorder %s21, 0
      %p110 = por %p108, %p109
      %p111 = scmp.ne.s32.totalorder %s99, %s100
      %p112 = scmp.eq.s32.totalorder %s22, 3
      %p113 = por %p111, %p112
      %p115 = scmp.ne.s32.totalorder %s100, %s114
      %p116 = scmp.eq.s32.totalorder %s22, 0
      %p117 = por %p115, %p116
      %s119 = sadd.s32 %s118, 1
      %p122 = scmp.eq.s32.totalorder %s16, 3
      %p123 = scmp.ne.s32.totalorder %s118, %s120
      %p124 = scmp.eq.s32.totalorder %s16, 0
      %p125 = por %p123, %p124
      %p126 = scmp.ne.s32.totalorder %s118, %s120
      %p127 = scmp.eq.s32.totalorder %s21, 3
      %p128 = por %p126, %p127
      %p129 = scmp.ne.s32.totalorder %s120, %s121
      %p130 = scmp.eq.s32.totalorder %s21, 0
      %p131 = por %p129, %p130
      %p132 = scmp.ne.s32.totalorder %s120, %s121
      %p133 = scmp.eq.s32.totalorder %s22, 3
      %p134 = por %p132, %p133
      %p136 = scmp.ne.s32.totalorder %s121, %s135
      %p137 = scmp.eq.s32.totalorder %s22, 0
      %p138 = por %p136, %p137
      %s140 = sadd.s32 %s139, 1
      %p143 = scmp.eq.s32.totalorder %s16, 3
      %p144 = scmp.ne.s32.totalorder %s139, %s141
      %p145 = scmp.eq.s32.totalorder %s16, 0
      %p146 = por %p144, %p145
      %p147 = scmp.ne.s32.totalorder %s139, %s141
      %p148 = scmp.eq.s32.totalorder %s21, 3
      %p149 = por %p147, %p148
      %p150 = scmp.ne.s32.totalorder %s141, %s142
      %p151 = scmp.eq.s32.totalorder %s21, 0
      %p152 = por %p150, %p151
      %p153 = scmp.ne.s32.totalorder %s141, %s142
      %p154 = scmp.eq.s32.totalorder %s22, 3
      %p155 = por %p153, %p154
      %p157 = scmp.ne.s32.totalorder %s142, %s156
      %p158 = scmp.eq.s32.totalorder %s22, 0
      %p159 = por %p157, %p158
      %s160 = ssub.s32 %s16, %s23
      %p161 = scmp.eq.s32.totalorder %s160, 0
      %s163 = sadd.s32 %s162, 1
      %s164 = scalar_select %p161, %s162, %s163
      %p167 = pneg %p161
      %p168 = scmp.eq.s32.totalorder %s16, 3
      %p169 = por %p167, %p168
      %p170 = scmp.ne.s32.totalorder %s162, %s165
      %p171 = scmp.eq.s32.totalorder %s16, 0
      %p172 = por %p170, %p171
      %p173 = scmp.ne.s32.totalorder %s162, %s165
      %p174 = scmp.eq.s32.totalorder %s21, 3
      %p175 = por %p173, %p174
      %p176 = scmp.ne.s32.totalorder %s165, %s166
      %p177 = scmp.eq.s32.totalorder %s21, 0
      %p178 = por %p176, %p177
      %p179 = scmp.ne.s32.totalorder %s165, %s166
      %p180 = scmp.eq.s32.totalorder %s22, 3
      %p181 = por %p179, %p180
      %p183 = scmp.ne.s32.totalorder %s166, %s182
      %p184 = scmp.eq.s32.totalorder %s22, 0
      %p185 = por %p183, %p184
      %p186 = scmp.le.s32.totalorder 1, %s16
      %p187 = scmp.lt.s32.totalorder %s16, 5
      %p188 = pnand %p186, %p187
      %p189 = pneg %p188
      // Predicated region
      $region9: #{tpu_custom_call.1} parent=5 // pred_check
        _
      $region10: #{tpu_custom_call.1} parent=5 // pred_check_branch
        %191 = sbr.rel (%p188) target = $region12
      $region11: #{tpu_custom_call.1} parent=5 // pred_region
        %s192 = ssub.s32 %s16, 1
        // Predicated region
        $region13: #{tpu_custom_call.1} parent=11 // pred_check
          %p193 = pneg %p89
        $region14: #{tpu_custom_call.1} parent=11 // pred_check_branch
          %195 = sbr.rel (%p193) target = $region16
        $region15: #{tpu_custom_call.1} parent=11 // pred_region
          _
        $region16: #{tpu_custom_call.1} parent=11 // pred_fallthru
          _
        // Predicated region
        $region17: #{tpu_custom_call.1} parent=11 // pred_check
          %p196 = pneg %p110
        $region18: #{tpu_custom_call.1} parent=11 // pred_check_branch
          %198 = sbr.rel (%p196) target = $region20
        $region19: #{tpu_custom_call.1} parent=11 // pred_region
          _
        $region20: #{tpu_custom_call.1} parent=11 // pred_fallthru
          _
        // Predicated region
        $region21: #{tpu_custom_call.1} parent=11 // pred_check
          %p199 = pneg %p131
        $region22: #{tpu_custom_call.1} parent=11 // pred_check_branch
          %201 = sbr.rel (%p199) target = $region24
        $region23: #{tpu_custom_call.1} parent=11 // pred_region
          %203 = vsyncadd [#allocation3], 0
          %s204 = sshll.u32 %s4, 4
          %s205 = int_to_ptr.hbm [resolvable:$true] %s204
          %s206 = sshll.u32 [#allocation2], 4
          %s207 = int_to_ptr.vmem [resolvable:$true] %s206
          %212 = dma.hbm_to_vmem [thread:$0]  %s205, 2048, %s207, [#allocation3], 128, 128, 8
        $region24: #{tpu_custom_call.1} parent=11 // pred_fallthru
          _
        // Predicated region
        $region25: #{tpu_custom_call.1} parent=11 // pred_check
          %p213 = pneg %p152
        $region26: #{tpu_custom_call.1} parent=11 // pred_check_branch
          %215 = sbr.rel (%p213) target = $region28
        $region27: #{tpu_custom_call.1} parent=11 // pred_region
          _
        $region28: #{tpu_custom_call.1} parent=11 // pred_fallthru
          _
      $region12: #{tpu_custom_call.1} parent=5 // pred_fallthru
        _
      %p216 = scmp.lt.s32.totalorder %s16, 4
      // Predicated region
      $region29: #{tpu_custom_call.1} parent=5 // pred_check
        %p217 = pneg %p216
      $region30: #{tpu_custom_call.1} parent=5 // pred_check_branch
        %219 = sbr.rel (%p217) target = $region32
      $region31: #{tpu_custom_call.1} parent=5 // pred_region
        // Predicated region
        $region33: #{tpu_custom_call.1} parent=31 // pred_check
          %p220 = pneg %p36
        $region34: #{tpu_custom_call.1} parent=31 // pred_check_branch
          %222 = sbr.rel (%p220) target = $region36
        $region35: #{tpu_custom_call.1} parent=31 // pred_region
          %p223 = scmp.lt.s32.totalorder %s16, 3
          %s224 = scalar_select %p223, %s16, 3
          %s225 = smul.addr %s224, 8
          %s226 = scalar_lea.vmem %s0, %s225
        $region36: #{tpu_custom_call.1} parent=31 // pred_fallthru
          _
        // Predicated region
        $region37: #{tpu_custom_call.1} parent=31 // pred_check
          %p227 = pneg %p62
        $region38: #{tpu_custom_call.1} parent=31 // pred_check_branch
          %229 = sbr.rel (%p227) target = $region40
        $region39: #{tpu_custom_call.1} parent=31 // pred_region
          %p230 = scmp.lt.s32.totalorder %s16, 3
          %s231 = scalar_select %p230, %s16, 3
          %s232 = smul.addr %s231, 8
          %s233 = scalar_lea.vmem %s1, %s232
        $region40: #{tpu_custom_call.1} parent=31 // pred_fallthru
          _
      $region32: #{tpu_custom_call.1} parent=5 // pred_fallthru
        _
      %p234 = scmp.le.s32.totalorder 1, %s16
      %p235 = scmp.lt.s32.totalorder %s16, 5
      %p236 = pnand %p234, %p235
      %p237 = pneg %p236
      // Predicated region
      $region41: #{tpu_custom_call.1} parent=5 // pred_check
        _
      $region42: #{tpu_custom_call.1} parent=5 // pred_check_branch
        %239 = sbr.rel (%p236) target = $region44
      $region43: #{tpu_custom_call.1} parent=5 // pred_region
        %s240 = ssub.s32 %s16, 1
        // Predicated region
        $region45: #{tpu_custom_call.1} parent=43 // pred_check
          %p241 = pneg %p131
        $region46: #{tpu_custom_call.1} parent=43 // pred_check_branch
          %243 = sbr.rel (%p241) target = $region48
        $region47: #{tpu_custom_call.1} parent=43 // pred_region
          %245 = dma.done [#allocation3], 2048
        $region48: #{tpu_custom_call.1} parent=43 // pred_fallthru
          _
        %p246 = scmp.lt.s32.totalorder %s21, 3
        %s247 = scalar_select %p246, %s21, 3
        %s248 = smul.addr %s247, 8
        %s249 = scalar_lea.vmem %s0, %s248
        %p250 = pneg %p42
        %p251 = pneg %p39
        %p252 = scmp.lt.s32.totalorder %s21, 3
        %s253 = scalar_select %p252, %s21, 3
        %s254 = smul.addr %s253, 8
        %s255 = scalar_lea.vmem %s1, %s254
        %p256 = pneg %p68
        %p257 = pneg %p65
        %p258 = pneg %p89
        %p259 = pneg %p86
        %p260 = pneg %p110
        %p261 = pneg %p107
        %p262 = pneg %p131
        %p263 = pneg %p128
        %p264 = pneg %p152
        %p265 = pneg %p149
        %p266 = pneg %p178
        %p267 = pneg %p175
        %s268 = sand.u32 %s165, 1
        %s269 = scalar_lea.sflag [#allocation4], %s268
        %s270 = sand.u32 %s165, 1
        %s271 = smul.addr %s270, 8
        %s272 = scalar_lea.vmem [#allocation5], %s271
        %p273 = scmp.lt.s32.totalorder %s21, 3
        %s274 = scalar_select %p273, %s21, 3
        %s275 = smul.addr %s274, 8
        %s276 = scalar_lea.vmem %s0, %s275
        %p277 = scmp.lt.s32.totalorder %s21, 3
        %s278 = scalar_select %p277, %s21, 3
        %s279 = smul.addr %s278, 8
        %s280 = scalar_lea.vmem %s1, %s279
        %v281 = vld [vmem:[%s276] sm:$0xff]
        %v282 = vld [vmem:[%s280] sm:$0xff]
        %283 = vadd.xlane.f32.xlu0 %v281
        %v284 = vpop.xlane.xlu0 %283
        %v285 = vmul.f32 %v281, %v281
        %286 = vadd.xlane.f32.xlu0 %v285
        %v287 = vpop.xlane.xlu0 %286
        %v288 = vmul.f32 %v284, 0.03125
        %v289 = vmul.f32 %v287, 0.03125
        %v290 = vmul.f32 %v288, %v288
        %v291 = vsub.f32 %v289, %v290
        %v292 = vsub.f32 %v281, %v288
        %v293 = vadd.f32 %v291, 1e-05
        %v294 = vrsqrt.pop %v293
        %v295 = vmul.f32 %v294, %v293
        %v296 = vmul.f32 %v295, %v294
        %v297 = vmul.f32 0.5, %v296
        %v298 = vsub.f32 1.5, %v297
        %v299 = vmul.f32 %v294, %v298
        %vm300 = vweird.f32 %v293
        %vm301 = vweird.f32 %v294
        %vm302 = vmor %vm300, %vm301
        %v303 = vsel %vm302, %v294, %v299
        %v304 = vmul.f32 %v292, %v303
        %v305 = vld [vmem:[%s2] sm:$0x1]
        %v307 = vperm.slane %v305, 0
        %v309 = vmul.f32 %v304, %v307
        %v310 = vld [vmem:[%s3] sm:$0x1]
        %v312 = vperm.slane %v310, 0
        %v314 = vadd.f32 %v309, %v312
        %316 = vset.pattern.permute.xlu0 0
        %317 = vperm.xlu0 %316, %v282
        %v318 = vpop.permute.xlu0 %317
        %v320 = vmul.f32 %v314, %v318
        %v321 = vld [vmem:[#allocation2] sm:$0xff]
        %v322 = vld [vmem:[#allocation2 + $0x8] sm:$0xff]
        %v323 = vld [vmem:[#allocation2 + $0x10] sm:$0xff]
        %v324 = vld [vmem:[#allocation2 + $0x18] sm:$0xff]
        %v325 = vld [vmem:[#allocation2 + $0x20] sm:$0xff]
        %v326 = vld [vmem:[#allocation2 + $0x28] sm:$0xff]
        %v327 = vld [vmem:[#allocation2 + $0x30] sm:$0xff]
        %v328 = vld [vmem:[#allocation2 + $0x38] sm:$0xff]
        %v329 = vld [vmem:[#allocation2 + $0x40] sm:$0xff]
        %v330 = vld [vmem:[#allocation2 + $0x48] sm:$0xff]
        %v331 = vld [vmem:[#allocation2 + $0x50] sm:$0xff]
        %v332 = vld [vmem:[#allocation2 + $0x58] sm:$0xff]
        %v333 = vld [vmem:[#allocation2 + $0x60] sm:$0xff]
        %v334 = vld [vmem:[#allocation2 + $0x68] sm:$0xff]
        %v335 = vld [vmem:[#allocation2 + $0x70] sm:$0xff]
        %v336 = vld [vmem:[#allocation2 + $0x78] sm:$0xff]
        %v337 = vld [vmem:[%s5] sm:$0x1]
        %v339 = vperm.slane %v337, 0
        %341 = vmatpush.msra.mxu0 %v336
        %342 = vmatpush.msra.mxu0 %v335
        %343 = vmatpush.msra.mxu0 %v334
        %344 = vmatpush.msra.mxu0 %v333
        %345 = vmatpush.msra.mxu0 %v332
        %346 = vmatpush.msra.mxu0 %v331
        %347 = vmatpush.msra.mxu0 %v330
        %348 = vmatpush.msra.mxu0 %v329
        %349 = vmatpush.msra.mxu0 %v328
        %350 = vmatpush.msra.mxu0 %v327
        %351 = vmatpush.msra.mxu0 %v326
        %352 = vmatpush.msra.mxu0 %v325
        %353 = vmatpush.msra.mxu0 %v324
        %354 = vmatpush.msra.mxu0 %v323
        %355 = vmatpush.msra.mxu0 %v322
        %356 = vmatpush.msra.mxu0 %v321
        %357 = vmatmul.f32.gmra.mxu0 %v320
        %v358 = vpop.f32.mrf.mxu0
        %v359 = vadd.f32 %v339, %v358
        %360 = vdwg.mxu0
        %v361 = vadd.f32 %v281, %v359
        %v362 = vmul.f32 %v361, %v318
        %363 = vst [vmem:[%s272] sm:$0xff] %v362
        %s364 = sand.u32 %s165, 1
        %s365 = scalar_lea.sflag [#allocation4], %s364
        %s366 = sand.u32 %s165, 1
        %s367 = smul.addr %s366, 8
        %s368 = scalar_lea.vmem [#allocation5], %s367
        // Predicated region
        $region49: #{tpu_custom_call.1} parent=43 // pred_check
          %p369 = pneg %p175
        $region50: #{tpu_custom_call.1} parent=43 // pred_check_branch
          %371 = sbr.rel (%p369) target = $region52
        $region51: #{tpu_custom_call.1} parent=43 // pred_region
          %373 = vsyncadd %s365, 0
          %s374 = smul.addr %s21, 8
          %s375 = scalar_lea.hbm %s6, %s374
          %s377 = sshll.u32 %s368, 4
          %s378 = int_to_ptr.vmem [resolvable:$true] %s377
          %s379 = sshll.u32 %s375, 4
          %s380 = int_to_ptr.hbm [resolvable:$true] %s379
          %382 = dma.vmem_to_hbm [thread:$0]  %s378, 128, %s380, %s365
        $region52: #{tpu_custom_call.1} parent=43 // pred_fallthru
          _
      $region44: #{tpu_custom_call.1} parent=5 // pred_fallthru
        _
      %p383 = scmp.le.s32.totalorder 2, %s16
      // Predicated region
      $region53: #{tpu_custom_call.1} parent=5 // pred_check
        %p384 = pneg %p383
      $region54: #{tpu_custom_call.1} parent=5 // pred_check_branch
        %386 = sbr.rel (%p384) target = $region56
      $region55: #{tpu_custom_call.1} parent=5 // pred_region
        %s387 = ssub.s32 %s16, 2
        // Predicated region
        $region57: #{tpu_custom_call.1} parent=55 // pred_check
          %p388 = pneg %p181
        $region58: #{tpu_custom_call.1} parent=55 // pred_check_branch
          %390 = sbr.rel (%p388) target = $region60
        $region59: #{tpu_custom_call.1} parent=55 // pred_region
          %s391 = sand.u32 %s166, 1
          %s392 = scalar_lea.sflag [#allocation4], %s391
          %s393 = sand.u32 %s166, 1
          %s394 = smul.addr %s393, 8
          %s395 = scalar_lea.vmem [#allocation5], %s394
          %397 = dma.done %s392, 128
        $region60: #{tpu_custom_call.1} parent=55 // pred_fallthru
          _
      $region56: #{tpu_custom_call.1} parent=5 // pred_fallthru
        _
    $region6: #{tpu_custom_call.1} parent=1 // loop_footer
      %s20 = sadd.s32 1, %s16
    $region7: #{tpu_custom_call.1} parent=1 // loop_footer_branch
      %15 = sbr.rel target = $region3
    $region8: #{tpu_custom_call.1} parent=1 // loop_exit
      _
    %398 = vsyncpa [#allocation3], 1
    %s399 = scalar_lea.sflag [#allocation3], 1
    %400 = vsyncpa %s399, 1
    %401 = vsyncpa [#allocation4], 1
    %s402 = scalar_lea.sflag [#allocation4], 1
    %403 = vsyncpa %s402, 1

</llo_original>
